<compile_context>
chip_gen: v7x
topology: tpu7x:2x2x1
jax: 0.10.0
libtpu: 0.0.40
codegen_flags: <defaults>
</compile_context>

<pallas_src>
import numpy as np
import jax
import jax.numpy as jnp
from jax.experimental import pallas as pl
from jax.experimental.pallas import tpu as pltpu

EPSILON = float(np.finfo(np.float32).eps)
LANE = 128
SUBLANE = 8


def _round_up(v, m):
    return (v + m - 1) // m * m


def _make_kernel(n_layers, comp_pad, l_1, l_2):
    """Kernel body with static layer count / padding / regularizers baked in."""
    reg = float(l_1) + EPSILON  # constant part of the denominator (> 0)

    def kernel(h_ref, x_ref, w1t_ref, w2t_ref, o_ref):
        # All-layer numerators in a single lane-dense MXU call:
        #   (tb, feat_pad) @ (feat_pad, n_layers*comp_pad) -> (tb, n_layers*comp_pad), f32.
        nums = jnp.dot(x_ref[...], w2t_ref[...],
                       preferred_element_type=jnp.float32)

        h = h_ref[...]                                        # (tb, comp_pad) f32 carry
        for l in range(n_layers):                             # fully-unrolled serial recurrence
            # static, 128-aligned (tile-aligned) slice of the precomputed numerators
            num = nums[:, l * comp_pad:(l + 1) * comp_pad]
            # tiny (tb, C) @ (C, C) f32 matmul on the MXU
            fc1 = jnp.dot(h, w1t_ref[l], preferred_element_type=jnp.float32)
            denom = fc1 + (l_2 * h + reg)
            # reciprocal goes to the EUP slot instead of a VALU divide
            h = num * pl.reciprocal(denom, approx=False) * h

        o_ref[...] = h                                        # one lane-dense store

    return kernel


def unsupernet_forward(h, x, w1t_stack, w2t_stack, l_1=0.0, l_2=0.0, block_b=256):
    """Run the full n_layers multiplicative-update net in one pallas_call.

    h          : (B, comp)                 float32
    x          : (B, features)             float32 or bfloat16
    w1t_stack  : (n_layers, comp, comp)    float32  (already transposed: fc1(y) = y @ W1^T)
    w2t_stack  : (n_layers, features, comp) float32 or bfloat16 (already transposed)
    """
    n_layers, comp, comp2 = w1t_stack.shape
    assert comp == comp2
    B, features = x.shape
    assert h.shape == (B, comp)
    assert w2t_stack.shape == (n_layers, features, comp)

    comp_pad = _round_up(comp, LANE)
    feat_pad = _round_up(features, LANE)
    tb = min(block_b, _round_up(B, SUBLANE))   # batch tile (multiple of 8)
    b_pad = _round_up(B, tb)

    # Zero-pad.  Padded h rows / comp columns stay exactly zero through every layer:
    #   numerator = 0, denominator = l_1 + EPSILON > 0  =>  delta * h = 0.
    h_p = jnp.pad(h.astype(jnp.float32), ((0, b_pad - B), (0, comp_pad - comp)))
    x_p = jnp.pad(x, ((0, b_pad - B), (0, feat_pad - features)))
    w1t_p = jnp.pad(w1t_stack.astype(jnp.float32),
                    ((0, 0), (0, comp_pad - comp), (0, comp_pad - comp)))
    # Flatten per-layer W2^T into one (feat_pad, n_layers*comp_pad) matrix so the
    # numerators of every layer come from a single MXU call inside the kernel.
    w2t_p = jnp.pad(w2t_stack,
                    ((0, 0), (0, feat_pad - features), (0, comp_pad - comp)))
    w2t_flat = jnp.transpose(w2t_p, (1, 0, 2)).reshape(feat_pad, n_layers * comp_pad)

    kernel = _make_kernel(n_layers, comp_pad, float(l_1), float(l_2))

    out_p = pl.pallas_call(
        kernel,
        out_shape=jax.ShapeDtypeStruct((b_pad, comp_pad), jnp.float32),
        grid_spec=pltpu.PrefetchScalarGridSpec(
            num_scalar_prefetch=0,
            grid=(b_pad // tb,),                       # independent batch tiles
            in_specs=[
                pl.BlockSpec((tb, comp_pad), lambda b: (b, 0)),
                pl.BlockSpec((tb, feat_pad), lambda b: (b, 0)),
                # full weight stacks resident in VMEM for every batch tile
                pl.BlockSpec((n_layers, comp_pad, comp_pad), lambda b: (0, 0, 0)),
                pl.BlockSpec((feat_pad, n_layers * comp_pad), lambda b: (0, 0)),
            ],
            out_specs=pl.BlockSpec((tb, comp_pad), lambda b: (b, 0)),
        ),
        compiler_params=pltpu.CompilerParams(
            # batch tiles are fully independent -> megacore sharding on v7x
            dimension_semantics=("parallel",),
        ),
    )(h_p, x_p, w1t_p, w2t_flat)

    return out_p[:B, :comp]


def unsupernet_reference(h, x, w1t_stack, w2t_stack, l_1=0.0, l_2=0.0):
    """Pure-JAX reference mirroring the PyTorch forward exactly (f32 math)."""
    h = h.astype(jnp.float32)
    x = x.astype(jnp.float32)
    for l in range(w1t_stack.shape[0]):
        fc1 = h @ w1t_stack[l].astype(jnp.float32)
        num = x @ w2t_stack[l].astype(jnp.float32)
        denom = fc1 + (l_2 * h + l_1 + EPSILON)
        h = (num / denom) * h
    return h


if __name__ == "__main__":
    # Small, NMF-flavoured (non-negative) shapes consistent with the module.
    n_layers = 4
    B = 8          # batch of sample vectors
    comp = 32      # number of components
    features = 64  # original feature length
    l_1 = 0.01
    l_2 = 0.02

    key = jax.random.PRNGKey(0)
    k_h, k_x, k_w1, k_w2 = jax.random.split(key, 4)

    # Deterministic, positive initializations (NMF operates on non-negatives).
    h0 = jax.random.uniform(k_h, (B, comp), dtype=jnp.float32, minval=0.1, maxval=1.0)
    x = jax.random.uniform(k_x, (B, features), dtype=jnp.float32, minval=0.1, maxval=1.0)

    # nn.Linear(comp, comp).weight has shape (comp, comp); fc1(y) = y @ W1.T.
    # nn.Linear(features, comp).weight has shape (comp, features); fc2(x) = x @ W2.T.
    # We store the transposed weights directly.
    bound1 = 1.0 / np.sqrt(comp)
    bound2 = 1.0 / np.sqrt(features)
    w1t_stack = jax.random.uniform(
        k_w1, (n_layers, comp, comp), dtype=jnp.float32, minval=0.0, maxval=bound1)
    w2t_stack = jax.random.uniform(
        k_w2, (n_layers, features, comp), dtype=jnp.float32, minval=0.0, maxval=bound2)

    # The kernel streams x and W2^T in bf16 (halves HBM traffic at real scale, bf16 MXU
    # path with f32 accumulation).  The reference uses the SAME bf16-rounded values so
    # the comparison tests the kernel, not the quantization.
    x_lp = x.astype(jnp.bfloat16)
    w2t_lp = w2t_stack.astype(jnp.bfloat16)

    out = unsupernet_forward(h0, x_lp, w1t_stack, w2t_lp, l_1=l_1, l_2=l_2)
    out = jax.block_until_ready(out)

    ref = unsupernet_reference(h0, x_lp.astype(jnp.float32), w1t_stack,
                               w2t_lp.astype(jnp.float32), l_1=l_1, l_2=l_2)
    np.testing.assert_allclose(np.asarray(out), np.asarray(ref), rtol=1e-5, atol=1e-5)

    print("KERNEL_OK")
</pallas_src>

<mosaic_0001>
module attributes {stable_mosaic.version = 11 : i64} {
  func.func @kernel(%arg0: i32, %arg1: memref<8x128xf32, #tpu.memory_space<vmem>>, %arg2: memref<8x128xbf16, #tpu.memory_space<vmem>>, %arg3: memref<4x128x128xf32, #tpu.memory_space<vmem>>, %arg4: memref<128x512xbf16, #tpu.memory_space<vmem>>, %arg5: memref<8x128xf32, #tpu.memory_space<vmem>>) attributes {dimension_semantics = [#tpu.dimension_semantics<parallel>], iteration_bounds = array<i64: 1>, scalar_prefetch = 0 : i64, scratch_operands = 0 : i64, tpu.core_type = #tpu.core_type<tc>, window_params = [{transform_indices = @transform_0, window_bounds = array<i64: 8, 128>}, {transform_indices = @transform_1, window_bounds = array<i64: 8, 128>}, {pipeline_mode = #tpu.pipeline_mode<synchronous>, transform_indices = @transform_2, window_bounds = array<i64: 4, 128, 128>}, {pipeline_mode = #tpu.pipeline_mode<synchronous>, transform_indices = @transform_3, window_bounds = array<i64: 128, 512>}, {transform_indices = @transform_4, window_bounds = array<i64: 8, 128>}]} {
    %c0 = arith.constant 0 : index
    %c0_0 = arith.constant 0 : index
    %0 = vector.load %arg2[%c0, %c0_0] : memref<8x128xbf16, #tpu.memory_space<vmem>>, vector<8x128xbf16>
    %c0_1 = arith.constant 0 : index
    %c0_2 = arith.constant 0 : index
    %1 = vector.load %arg4[%c0_1, %c0_2] : memref<128x512xbf16, #tpu.memory_space<vmem>>, vector<128x512xbf16>
    %cst = arith.constant dense<0.000000e+00> : vector<8x512xf32>
    %2 = tpu.matmul %0, %1, %cst {dimension_numbers = #tpu.dot_dimension_numbers<[1], [0], [0], [1], [0, 0, 1, 1], [], []>} : vector<8x128xbf16>, vector<128x512xbf16>, vector<8x512xf32> -> vector<8x512xf32>
    %c0_3 = arith.constant 0 : index
    %c0_4 = arith.constant 0 : index
    %3 = vector.load %arg1[%c0_3, %c0_4] : memref<8x128xf32, #tpu.memory_space<vmem>>, vector<8x128xf32>
    %4 = vector.extract_strided_slice %2 {offsets = [0, 0], sizes = [8, 128], strides = [1, 1]} : vector<8x512xf32> to vector<8x128xf32>
    %c0_5 = arith.constant 0 : index
    %c0_6 = arith.constant 0 : index
    %c0_7 = arith.constant 0 : index
    %5 = vector.load %arg3[%c0_5, %c0_6, %c0_7] : memref<4x128x128xf32, #tpu.memory_space<vmem>>, vector<1x128x128xf32>
    %6 = vector.shape_cast %5 : vector<1x128x128xf32> to vector<128x128xf32>
    %cst_8 = arith.constant dense<0.000000e+00> : vector<8x128xf32>
    %7 = tpu.matmul %3, %6, %cst_8 {dimension_numbers = #tpu.dot_dimension_numbers<[1], [0], [0], [1], [0, 0, 1, 1], [], []>} : vector<8x128xf32>, vector<128x128xf32>, vector<8x128xf32> -> vector<8x128xf32>
    %cst_9 = arith.constant 2.000000e-02 : f32
    %8 = vector.broadcast %cst_9 : f32 to vector<8x128xf32>
    %9 = arith.mulf %8, %3 : vector<8x128xf32>
    %cst_10 = arith.constant 0.010000119 : f32
    %10 = vector.broadcast %cst_10 : f32 to vector<8x128xf32>
    %11 = arith.addf %9, %10 : vector<8x128xf32>
    %12 = arith.addf %7, %11 : vector<8x128xf32>
    %13 = tpu.reciprocal %12 : vector<8x128xf32> -> vector<8x128xf32>
    %14 = arith.mulf %4, %13 : vector<8x128xf32>
    %15 = arith.mulf %14, %3 : vector<8x128xf32>
    %16 = vector.extract_strided_slice %2 {offsets = [0, 128], sizes = [8, 128], strides = [1, 1]} : vector<8x512xf32> to vector<8x128xf32>
    %c1 = arith.constant 1 : index
    %c0_11 = arith.constant 0 : index
    %c0_12 = arith.constant 0 : index
    %17 = vector.load %arg3[%c1, %c0_11, %c0_12] : memref<4x128x128xf32, #tpu.memory_space<vmem>>, vector<1x128x128xf32>
    %18 = vector.shape_cast %17 : vector<1x128x128xf32> to vector<128x128xf32>
    %cst_13 = arith.constant dense<0.000000e+00> : vector<8x128xf32>
    %19 = tpu.matmul %15, %18, %cst_13 {dimension_numbers = #tpu.dot_dimension_numbers<[1], [0], [0], [1], [0, 0, 1, 1], [], []>} : vector<8x128xf32>, vector<128x128xf32>, vector<8x128xf32> -> vector<8x128xf32>
    %cst_14 = arith.constant 2.000000e-02 : f32
    %20 = vector.broadcast %cst_14 : f32 to vector<8x128xf32>
    %21 = arith.mulf %20, %15 : vector<8x128xf32>
    %cst_15 = arith.constant 0.010000119 : f32
    %22 = vector.broadcast %cst_15 : f32 to vector<8x128xf32>
    %23 = arith.addf %21, %22 : vector<8x128xf32>
    %24 = arith.addf %19, %23 : vector<8x128xf32>
    %25 = tpu.reciprocal %24 : vector<8x128xf32> -> vector<8x128xf32>
    %26 = arith.mulf %16, %25 : vector<8x128xf32>
    %27 = arith.mulf %26, %15 : vector<8x128xf32>
    %28 = vector.extract_strided_slice %2 {offsets = [0, 256], sizes = [8, 128], strides = [1, 1]} : vector<8x512xf32> to vector<8x128xf32>
    %c2 = arith.constant 2 : index
    %c0_16 = arith.constant 0 : index
    %c0_17 = arith.constant 0 : index
    %29 = vector.load %arg3[%c2, %c0_16, %c0_17] : memref<4x128x128xf32, #tpu.memory_space<vmem>>, vector<1x128x128xf32>
    %30 = vector.shape_cast %29 : vector<1x128x128xf32> to vector<128x128xf32>
    %cst_18 = arith.constant dense<0.000000e+00> : vector<8x128xf32>
    %31 = tpu.matmul %27, %30, %cst_18 {dimension_numbers = #tpu.dot_dimension_numbers<[1], [0], [0], [1], [0, 0, 1, 1], [], []>} : vector<8x128xf32>, vector<128x128xf32>, vector<8x128xf32> -> vector<8x128xf32>
    %cst_19 = arith.constant 2.000000e-02 : f32
    %32 = vector.broadcast %cst_19 : f32 to vector<8x128xf32>
    %33 = arith.mulf %32, %27 : vector<8x128xf32>
    %cst_20 = arith.constant 0.010000119 : f32
    %34 = vector.broadcast %cst_20 : f32 to vector<8x128xf32>
    %35 = arith.addf %33, %34 : vector<8x128xf32>
    %36 = arith.addf %31, %35 : vector<8x128xf32>
    %37 = tpu.reciprocal %36 : vector<8x128xf32> -> vector<8x128xf32>
    %38 = arith.mulf %28, %37 : vector<8x128xf32>
    %39 = arith.mulf %38, %27 : vector<8x128xf32>
    %40 = vector.extract_strided_slice %2 {offsets = [0, 384], sizes = [8, 128], strides = [1, 1]} : vector<8x512xf32> to vector<8x128xf32>
    %c3 = arith.constant 3 : index
    %c0_21 = arith.constant 0 : index
    %c0_22 = arith.constant 0 : index
    %41 = vector.load %arg3[%c3, %c0_21, %c0_22] : memref<4x128x128xf32, #tpu.memory_space<vmem>>, vector<1x128x128xf32>
    %42 = vector.shape_cast %41 : vector<1x128x128xf32> to vector<128x128xf32>
    %cst_23 = arith.constant dense<0.000000e+00> : vector<8x128xf32>
    %43 = tpu.matmul %39, %42, %cst_23 {dimension_numbers = #tpu.dot_dimension_numbers<[1], [0], [0], [1], [0, 0, 1, 1], [], []>} : vector<8x128xf32>, vector<128x128xf32>, vector<8x128xf32> -> vector<8x128xf32>
    %cst_24 = arith.constant 2.000000e-02 : f32
    %44 = vector.broadcast %cst_24 : f32 to vector<8x128xf32>
    %45 = arith.mulf %44, %39 : vector<8x128xf32>
    %cst_25 = arith.constant 0.010000119 : f32
    %46 = vector.broadcast %cst_25 : f32 to vector<8x128xf32>
    %47 = arith.addf %45, %46 : vector<8x128xf32>
    %48 = arith.addf %43, %47 : vector<8x128xf32>
    %49 = tpu.reciprocal %48 : vector<8x128xf32> -> vector<8x128xf32>
    %50 = arith.mulf %40, %49 : vector<8x128xf32>
    %51 = arith.mulf %50, %39 : vector<8x128xf32>
    %c0_26 = arith.constant 0 : index
    %c0_27 = arith.constant 0 : index
    %52 = vector.load %arg5[%c0_26, %c0_27] : memref<8x128xf32, #tpu.memory_space<vmem>>, vector<8x128xf32>
    tpu.vector_store %arg5[%c0_26, %c0_27], %51 {strides = array<i32>} : memref<8x128xf32, #tpu.memory_space<vmem>>, vector<8x128xf32>,
    return
  }
  func.func @transform_0(%arg0: i32) -> (i32, i32) {
    %c0_i32 = arith.constant 0 : i32
    %c0_i32_0 = arith.constant 0 : i32
    return %arg0, %c0_i32 : i32, i32
  }
  func.func @transform_1(%arg0: i32) -> (i32, i32) {
    %c0_i32 = arith.constant 0 : i32
    %c0_i32_0 = arith.constant 0 : i32
    return %arg0, %c0_i32 : i32, i32
  }
  func.func @transform_2(%arg0: i32) -> (i32, i32, i32) {
    %c0_i32 = arith.constant 0 : i32
    %c0_i32_0 = arith.constant 0 : i32
    %c0_i32_1 = arith.constant 0 : i32
    %c0_i32_2 = arith.constant 0 : i32
    return %c0_i32, %c0_i32_0, %c0_i32_1 : i32, i32, i32
  }
  func.func @transform_3(%arg0: i32) -> (i32, i32) {
    %c0_i32 = arith.constant 0 : i32
    %c0_i32_0 = arith.constant 0 : i32
    %c0_i32_1 = arith.constant 0 : i32
    return %c0_i32, %c0_i32_0 : i32, i32
  }
  func.func @transform_4(%arg0: i32) -> (i32, i32) {
    %c0_i32 = arith.constant 0 : i32
    %c0_i32_0 = arith.constant 0 : i32
    return %arg0, %c0_i32 : i32, i32
  }
}

</mosaic_0001>

<llo_original>
// kernel: tpu_custom_call.1
$region0: #{tpu_custom_call.1}
  #allocation0 [shape = 'u32[]', space=smem, size = 0x4, offset = 0x4, fixed_abs, tag = 'smem constant byte address 0x4 - core index']
  #allocation1 [shape = 'u32[144,128]{1,0:T(1,128)}', space=vmem, size = 0x12000, scoped, tag = 'internal scratch']
  %s0 = inlined_call_operand.hbm [shape: f32[8,128], index: 0, kind: input, shape index: {}]
  %s1 = inlined_call_operand.hbm [shape: bf16[8,128], index: 1, kind: input, shape index: {}]
  %s2 = inlined_call_operand.hbm [shape: f32[4,128,128], index: 2, kind: input, shape index: {}]
  %s3 = inlined_call_operand.hbm [shape: bf16[128,512], index: 3, kind: input, shape index: {}]
  %s4 = inlined_call_operand.hbm [shape: f32[8,128], index: 4, kind: output, shape index: {}]
  %s5 = sld [smem:[#allocation0]]
  $region42: #{tpu_custom_call.1} parent=0
    _
  %s7 = ssub.s32 1, %s5
  %s8 = scalar_select 0, %s7, %s5
  $region1: #{tpu_custom_call.1} parent=0
    #allocation2 [shape = 'u8[4096]{0}', space=vmem, size = 0x1000, scoped, tag = 'input window, operand 0, single buffered']
    #allocation3 [shape = 's32[1]{0}', space=sflag, size = 0x4, scoped, tag = 'scoped memory for tpu_custom_call.1']
    #allocation4 [shape = 's32[1]{0}', space=sflag, size = 0x4, scoped, tag = 'scoped memory for tpu_custom_call.1']
    #allocation5 [shape = 'u8[2048]{0}', space=vmem, size = 0x800, scoped, tag = 'input window, operand 1, single buffered']
    #allocation6 [shape = 's32[1]{0}', space=sflag, size = 0x4, scoped, tag = 'scoped memory for tpu_custom_call.1']
    #allocation7 [shape = 'u8[262144]{0}', space=vmem, size = 0x40000, scoped, tag = 'input window, operand 2, single buffered']
    #allocation8 [shape = 'u8[131072]{0}', space=vmem, size = 0x20000, scoped, tag = 'input window, operand 3, single buffered']
    #allocation9 [shape = 's32[1]{0}', space=sflag, size = 0x4, scoped, tag = 'scoped memory for tpu_custom_call.1']
    #allocation10 [shape = 'u8[4096]{0}', space=vmem, size = 0x1000, scoped, tag = 'output window, operand 0, single buffered']
    %9 = vsyncpa [#allocation3], 0
    %10 = vsyncpa [#allocation6], 0
    %11 = vsyncpa [#allocation9], 0
    %12 = vsyncpa [#allocation4], 0
    // Predicated region
    $region2: #{tpu_custom_call.1} parent=1 // pred_check
      _
    $region3: #{tpu_custom_call.1} parent=1 // pred_check_branch
      %14 = sbr.rel (0) target = $region5
    $region4: #{tpu_custom_call.1} parent=1 // pred_region
      %s16 = ssub.s32 128, 128
      %17 = vsyncadd [#allocation3], %s16
      %s19 = sshll.u32 [#allocation2], 4
      %s20 = int_to_ptr.vmem [resolvable:$true] %s19
      %22 = dma.hbm_to_vmem [thread:$0]  %s0, 128, %s20, [#allocation3]
    $region5: #{tpu_custom_call.1} parent=1 // pred_fallthru
      _
    // Predicated region
    $region6: #{tpu_custom_call.1} parent=1 // pred_check
      _
    $region7: #{tpu_custom_call.1} parent=1 // pred_check_branch
      %24 = sbr.rel (0) target = $region9
    $region8: #{tpu_custom_call.1} parent=1 // pred_region
      %s26 = ssub.s32 64, 64
      %27 = vsyncadd [#allocation6], %s26
      %s29 = sshll.u32 [#allocation5], 4
      %s30 = int_to_ptr.vmem [resolvable:$true] %s29
      %32 = dma.hbm_to_vmem [thread:$0]  %s1, 64, %s30, [#allocation6]
    $region9: #{tpu_custom_call.1} parent=1 // pred_fallthru
      _
    // Predicated region
    $region10: #{tpu_custom_call.1} parent=1 // pred_check
      _
    $region11: #{tpu_custom_call.1} parent=1 // pred_check_branch
      %34 = sbr.rel (0) target = $region13
    $region12: #{tpu_custom_call.1} parent=1 // pred_region
      %s36 = ssub.s32 8192, 8192
      %37 = vsyncadd [#allocation6], %s36
      %s38 = sshll.u32 [#allocation7], 4
      %s39 = int_to_ptr.vmem [resolvable:$true] %s38
      %44 = dma.hbm_to_vmem [thread:$0]  %s2, 8192, %s39, [#allocation6], 128, 128, 8
    $region13: #{tpu_custom_call.1} parent=1 // pred_fallthru
      _
    // Predicated region
    $region14: #{tpu_custom_call.1} parent=1 // pred_check
      _
    $region15: #{tpu_custom_call.1} parent=1 // pred_check_branch
      %46 = sbr.rel (0) target = $region17
    $region16: #{tpu_custom_call.1} parent=1 // pred_region
      %s48 = ssub.s32 4096, 4096
      %49 = vsyncadd [#allocation9], %s48
      %s50 = sshll.u32 [#allocation8], 4
      %s51 = int_to_ptr.vmem [resolvable:$true] %s50
      %56 = dma.hbm_to_vmem [thread:$0]  %s3, 4096, %s51, [#allocation9], 256, 256, 16
    $region17: #{tpu_custom_call.1} parent=1 // pred_fallthru
      _
    // Predicated region
    $region18: #{tpu_custom_call.1} parent=1 // pred_check
      _
    $region19: #{tpu_custom_call.1} parent=1 // pred_check_branch
      %58 = sbr.rel (0) target = $region21
    $region20: #{tpu_custom_call.1} parent=1 // pred_region
      %59 = dma.done [#allocation3], 128
    $region21: #{tpu_custom_call.1} parent=1 // pred_fallthru
      _
    // Predicated region
    $region22: #{tpu_custom_call.1} parent=1 // pred_check
      _
    $region23: #{tpu_custom_call.1} parent=1 // pred_check_branch
      %61 = sbr.rel (0) target = $region25
    $region24: #{tpu_custom_call.1} parent=1 // pred_region
      %62 = dma.done [#allocation6], 64
    $region25: #{tpu_custom_call.1} parent=1 // pred_fallthru
      _
    // Predicated region
    $region26: #{tpu_custom_call.1} parent=1 // pred_check
      _
    $region27: #{tpu_custom_call.1} parent=1 // pred_check_branch
      %64 = sbr.rel (0) target = $region29
    $region28: #{tpu_custom_call.1} parent=1 // pred_region
      %65 = dma.done [#allocation6], 8192
    $region29: #{tpu_custom_call.1} parent=1 // pred_fallthru
      _
    // Predicated region
    $region30: #{tpu_custom_call.1} parent=1 // pred_check
      _
    $region31: #{tpu_custom_call.1} parent=1 // pred_check_branch
      %67 = sbr.rel (0) target = $region33
    $region32: #{tpu_custom_call.1} parent=1 // pred_region
      %68 = dma.done [#allocation9], 4096
    $region33: #{tpu_custom_call.1} parent=1 // pred_fallthru
      _
    %v70 = vld [vmem:[#allocation5] sm:$0xf]
    %v71 = vld [vmem:[#allocation8] sm:$0xff]
    %v72 = vld [vmem:[#allocation8 + $0x8] sm:$0xff]
    %v73 = vld [vmem:[#allocation8 + $0x10] sm:$0xff]
    %v74 = vld [vmem:[#allocation8 + $0x18] sm:$0xff]
    %v75 = vld [vmem:[#allocation8 + $0x20] sm:$0xff]
    %v76 = vld [vmem:[#allocation8 + $0x28] sm:$0xff]
    %v77 = vld [vmem:[#allocation8 + $0x30] sm:$0xff]
    %v78 = vld [vmem:[#allocation8 + $0x38] sm:$0xff]
    %v79 = vld [vmem:[#allocation8 + $0x40] sm:$0xff]
    %v80 = vld [vmem:[#allocation8 + $0x48] sm:$0xff]
    %v81 = vld [vmem:[#allocation8 + $0x50] sm:$0xff]
    %v82 = vld [vmem:[#allocation8 + $0x58] sm:$0xff]
    %v83 = vld [vmem:[#allocation8 + $0x60] sm:$0xff]
    %v84 = vld [vmem:[#allocation8 + $0x68] sm:$0xff]
    %v85 = vld [vmem:[#allocation8 + $0x70] sm:$0xff]
    %v86 = vld [vmem:[#allocation8 + $0x78] sm:$0xff]
    %v87 = vld [vmem:[#allocation8 + $0x80] sm:$0xff]
    %v88 = vld [vmem:[#allocation8 + $0x88] sm:$0xff]
    %v89 = vld [vmem:[#allocation8 + $0x90] sm:$0xff]
    %v90 = vld [vmem:[#allocation8 + $0x98] sm:$0xff]
    %v91 = vld [vmem:[#allocation8 + $0xa0] sm:$0xff]
    %v92 = vld [vmem:[#allocation8 + $0xa8] sm:$0xff]
    %v93 = vld [vmem:[#allocation8 + $0xb0] sm:$0xff]
    %v94 = vld [vmem:[#allocation8 + $0xb8] sm:$0xff]
    %v95 = vld [vmem:[#allocation8 + $0xc0] sm:$0xff]
    %v96 = vld [vmem:[#allocation8 + $0xc8] sm:$0xff]
    %v97 = vld [vmem:[#allocation8 + $0xd0] sm:$0xff]
    %v98 = vld [vmem:[#allocation8 + $0xd8] sm:$0xff]
    %v99 = vld [vmem:[#allocation8 + $0xe0] sm:$0xff]
    %v100 = vld [vmem:[#allocation8 + $0xe8] sm:$0xff]
    %v101 = vld [vmem:[#allocation8 + $0xf0] sm:$0xff]
    %v102 = vld [vmem:[#allocation8 + $0xf8] sm:$0xff]
    %v135 = vunpack.c.l.b16 %v71
    %v136 = vunpack.c.h.b16 %v71
    %v137 = vunpack.c.l.b16 %v72
    %v138 = vunpack.c.h.b16 %v72
    %v139 = vunpack.c.l.b16 %v73
    %v140 = vunpack.c.h.b16 %v73
    %v141 = vunpack.c.l.b16 %v74
    %v142 = vunpack.c.h.b16 %v74
    %v143 = vunpack.c.l.b16 %v75
    %v144 = vunpack.c.h.b16 %v75
    %v145 = vunpack.c.l.b16 %v76
    %v146 = vunpack.c.h.b16 %v76
    %v147 = vunpack.c.l.b16 %v77
    %v148 = vunpack.c.h.b16 %v77
    %v149 = vunpack.c.l.b16 %v78
    %v150 = vunpack.c.h.b16 %v78
    %v151 = vunpack.c.l.b16 %v79
    %v152 = vunpack.c.h.b16 %v79
    %v153 = vunpack.c.l.b16 %v80
    %v154 = vunpack.c.h.b16 %v80
    %v155 = vunpack.c.l.b16 %v81
    %v156 = vunpack.c.h.b16 %v81
    %v157 = vunpack.c.l.b16 %v82
    %v158 = vunpack.c.h.b16 %v82
    %v159 = vunpack.c.l.b16 %v83
    %v160 = vunpack.c.h.b16 %v83
    %v161 = vunpack.c.l.b16 %v84
    %v162 = vunpack.c.h.b16 %v84
    %v163 = vunpack.c.l.b16 %v85
    %v164 = vunpack.c.h.b16 %v85
    %v165 = vunpack.c.l.b16 %v86
    %v166 = vunpack.c.h.b16 %v86
    %v167 = vunpack.c.l.b16 %v87
    %v168 = vunpack.c.h.b16 %v87
    %v169 = vunpack.c.l.b16 %v88
    %v170 = vunpack.c.h.b16 %v88
    %v171 = vunpack.c.l.b16 %v89
    %v172 = vunpack.c.h.b16 %v89
    %v173 = vunpack.c.l.b16 %v90
    %v174 = vunpack.c.h.b16 %v90
    %v175 = vunpack.c.l.b16 %v91
    %v176 = vunpack.c.h.b16 %v91
    %v177 = vunpack.c.l.b16 %v92
    %v178 = vunpack.c.h.b16 %v92
    %v179 = vunpack.c.l.b16 %v93
    %v180 = vunpack.c.h.b16 %v93
    %v181 = vunpack.c.l.b16 %v94
    %v182 = vunpack.c.h.b16 %v94
    %v183 = vunpack.c.l.b16 %v95
    %v184 = vunpack.c.h.b16 %v95
    %v185 = vunpack.c.l.b16 %v96
    %v186 = vunpack.c.h.b16 %v96
    %v187 = vunpack.c.l.b16 %v97
    %v188 = vunpack.c.h.b16 %v97
    %v189 = vunpack.c.l.b16 %v98
    %v190 = vunpack.c.h.b16 %v98
    %v191 = vunpack.c.l.b16 %v99
    %v192 = vunpack.c.h.b16 %v99
    %v193 = vunpack.c.l.b16 %v100
    %v194 = vunpack.c.h.b16 %v100
    %v195 = vunpack.c.l.b16 %v101
    %v196 = vunpack.c.h.b16 %v101
    %v197 = vunpack.c.l.b16 %v102
    %v198 = vunpack.c.h.b16 %v102
    %v199 = vpack.c.b16 %v139, %v135
    %v200 = vpack.c.b16 %v140, %v136
    %v201 = vpack.c.b16 %v141, %v137
    %v202 = vpack.c.b16 %v142, %v138
    %v203 = vpack.c.b16 %v147, %v143
    %v204 = vpack.c.b16 %v148, %v144
    %v205 = vpack.c.b16 %v149, %v145
    %v206 = vpack.c.b16 %v150, %v146
    %v207 = vpack.c.b16 %v155, %v151
    %v208 = vpack.c.b16 %v156, %v152
    %v209 = vpack.c.b16 %v157, %v153
    %v210 = vpack.c.b16 %v158, %v154
    %v211 = vpack.c.b16 %v163, %v159
    %v212 = vpack.c.b16 %v164, %v160
    %v213 = vpack.c.b16 %v165, %v161
    %v214 = vpack.c.b16 %v166, %v162
    %v215 = vpack.c.b16 %v171, %v167
    %v216 = vpack.c.b16 %v172, %v168
    %v217 = vpack.c.b16 %v173, %v169
    %v218 = vpack.c.b16 %v174, %v170
    %v219 = vpack.c.b16 %v179, %v175
    %v220 = vpack.c.b16 %v180, %v176
    %v221 = vpack.c.b16 %v181, %v177
    %v222 = vpack.c.b16 %v182, %v178
    %v223 = vpack.c.b16 %v187, %v183
    %v224 = vpack.c.b16 %v188, %v184
    %v225 = vpack.c.b16 %v189, %v185
    %v226 = vpack.c.b16 %v190, %v186
    %v227 = vpack.c.b16 %v195, %v191
    %v228 = vpack.c.b16 %v196, %v192
    %v229 = vpack.c.b16 %v197, %v193
    %v230 = vpack.c.b16 %v198, %v194
    %263 = vmatprep.subr.bf16.mxu0 %v200
    %264 = vmatpush1.bf16.msra.mxu0 %v199
    %265 = vmatprep.subr.bf16.mxu0 %v204
    %266 = vmatpush1.bf16.msra.mxu0 %v203
    %267 = vmatprep.subr.bf16.mxu0 %v208
    %268 = vmatpush1.bf16.msra.mxu0 %v207
    %269 = vmatprep.subr.bf16.mxu0 %v212
    %270 = vmatpush1.bf16.msra.mxu0 %v211
    %271 = vmatprep.subr.bf16.mxu0 %v216
    %272 = vmatpush1.bf16.msra.mxu0 %v215
    %273 = vmatprep.subr.bf16.mxu0 %v220
    %274 = vmatpush1.bf16.msra.mxu0 %v219
    %275 = vmatprep.subr.bf16.mxu0 %v224
    %276 = vmatpush1.bf16.msra.mxu0 %v223
    %277 = vmatprep.subr.bf16.mxu0 %v228
    %278 = vmatpush1.bf16.msra.mxu0 %v227
    %279 = vmatprep.subr.bf16.mxu0 0
    %280 = vmatpush1.bf16.msra.mxu0 0
    %281 = vmatprep.subr.bf16.mxu0 0
    %282 = vmatpush1.bf16.msra.mxu0 0
    %283 = vmatprep.subr.bf16.mxu0 0
    %284 = vmatpush1.bf16.msra.mxu0 0
    %285 = vmatprep.subr.bf16.mxu0 0
    %286 = vmatpush1.bf16.msra.mxu0 0
    %287 = vmatprep.subr.bf16.mxu0 0
    %288 = vmatpush1.bf16.msra.mxu0 0
    %289 = vmatprep.subr.bf16.mxu0 0
    %290 = vmatpush1.bf16.msra.mxu0 0
    %291 = vmatprep.subr.bf16.mxu0 0
    %292 = vmatpush1.bf16.msra.mxu0 0
    %293 = vmatprep.subr.bf16.mxu0 0
    %294 = vmatpush1.bf16.msra.mxu0 0
    %295 = vmatprep.mubr.bf16.mxu0 0
    %296 = vmatmul.mubr.bf16.gmra.mrb[0].mxu0 %v70
    %v297 = vpop.f32.mrb[0].mxu0
    %v298 = vadd.f32 0.0, %v297
    %v299 = vpop.f32.mrb[0].mxu0
    %v300 = vadd.f32 0.0, %v299
    %v301 = vpop.f32.mrb[0].mxu0
    %v302 = vpop.f32.mrb[0].mxu0
    %303 = vdwg.mxu0
    %304 = vmatprep.subr.bf16.mxu0 %v202
    %305 = vmatpush1.bf16.msra.mxu0 %v201
    %306 = vmatprep.subr.bf16.mxu0 %v206
    %307 = vmatpush1.bf16.msra.mxu0 %v205
    %308 = vmatprep.subr.bf16.mxu0 %v210
    %309 = vmatpush1.bf16.msra.mxu0 %v209
    %310 = vmatprep.subr.bf16.mxu0 %v214
    %311 = vmatpush1.bf16.msra.mxu0 %v213
    %312 = vmatprep.subr.bf16.mxu0 %v218
    %313 = vmatpush1.bf16.msra.mxu0 %v217
    %314 = vmatprep.subr.bf16.mxu0 %v222
    %315 = vmatpush1.bf16.msra.mxu0 %v221
    %316 = vmatprep.subr.bf16.mxu0 %v226
    %317 = vmatpush1.bf16.msra.mxu0 %v225
    %318 = vmatprep.subr.bf16.mxu0 %v230
    %319 = vmatpush1.bf16.msra.mxu0 %v229
    %320 = vmatprep.subr.bf16.mxu0 0
    %321 = vmatpush1.bf16.msra.mxu0 0
    %322 = vmatprep.subr.bf16.mxu0 0
    %323 = vmatpush1.bf16.msra.mxu0 0
    %324 = vmatprep.subr.bf16.mxu0 0
    %325 = vmatpush1.bf16.msra.mxu0 0
    %326 = vmatprep.subr.bf16.mxu0 0
    %327 = vmatpush1.bf16.msra.mxu0 0
    %328 = vmatprep.subr.bf16.mxu0 0
    %329 = vmatpush1.bf16.msra.mxu0 0
    %330 = vmatprep.subr.bf16.mxu0 0
    %331 = vmatpush1.bf16.msra.mxu0 0
    %332 = vmatprep.subr.bf16.mxu0 0
    %333 = vmatpush1.bf16.msra.mxu0 0
    %334 = vmatprep.subr.bf16.mxu0 0
    %335 = vmatpush1.bf16.msra.mxu0 0
    %336 = vmatprep.mubr.bf16.mxu0 0
    %337 = vmatmul.mubr.bf16.gmra.mrb[0].mxu0 %v70
    %v338 = vpop.f32.mrb[0].mxu0
    %v339 = vadd.f32 0.0, %v338
    %v340 = vpop.f32.mrb[0].mxu0
    %v341 = vadd.f32 0.0, %v340
    %v342 = vpop.f32.mrb[0].mxu0
    %v343 = vpop.f32.mrb[0].mxu0
    %344 = vdwg.mxu0
    %v345 = vld [vmem:[#allocation2] sm:$0xff]
    %v346 = vld [vmem:[#allocation7] sm:$0xff]
    %v347 = vld [vmem:[#allocation7 + $0x8] sm:$0xff]
    %v348 = vld [vmem:[#allocation7 + $0x10] sm:$0xff]
    %v349 = vld [vmem:[#allocation7 + $0x18] sm:$0xff]
    %v350 = vld [vmem:[#allocation7 + $0x20] sm:$0xff]
    %v351 = vld [vmem:[#allocation7 + $0x28] sm:$0xff]
    %v352 = vld [vmem:[#allocation7 + $0x30] sm:$0xff]
    %v353 = vld [vmem:[#allocation7 + $0x38] sm:$0xff]
    %v354 = vld [vmem:[#allocation7 + $0x40] sm:$0xff]
    %v355 = vld [vmem:[#allocation7 + $0x48] sm:$0xff]
    %v356 = vld [vmem:[#allocation7 + $0x50] sm:$0xff]
    %v357 = vld [vmem:[#allocation7 + $0x58] sm:$0xff]
    %v358 = vld [vmem:[#allocation7 + $0x60] sm:$0xff]
    %v359 = vld [vmem:[#allocation7 + $0x68] sm:$0xff]
    %v360 = vld [vmem:[#allocation7 + $0x70] sm:$0xff]
    %v361 = vld [vmem:[#allocation7 + $0x78] sm:$0xff]
    %v362 = vmul.f32 %v345, 0.02
    %v363 = vadd.f32 %v362, 0.010000119
    %364 = vmatprep.subr.mxu0 0.0
    %365 = vmatpush1.msra.mxu0 %v346
    %366 = vmatprep.subr.mxu0 0.0
    %367 = vmatpush1.msra.mxu0 %v347
    %368 = vmatprep.subr.mxu0 0.0
    %369 = vmatpush1.msra.mxu0 %v348
    %370 = vmatprep.subr.mxu0 0.0
    %371 = vmatpush1.msra.mxu0 %v349
    %372 = vmatprep.subr.mxu0 0.0
    %373 = vmatpush1.msra.mxu0 %v350
    %374 = vmatprep.subr.mxu0 0.0
    %375 = vmatpush1.msra.mxu0 %v351
    %376 = vmatprep.subr.mxu0 0.0
    %377 = vmatpush1.msra.mxu0 %v352
    %378 = vmatprep.subr.mxu0 0.0
    %379 = vmatpush1.msra.mxu0 %v353
    %380 = vmatprep.subr.mxu0 0.0
    %381 = vmatpush1.msra.mxu0 %v354
    %382 = vmatprep.subr.mxu0 0.0
    %383 = vmatpush1.msra.mxu0 %v355
    %384 = vmatprep.subr.mxu0 0.0
    %385 = vmatpush1.msra.mxu0 %v356
    %386 = vmatprep.subr.mxu0 0.0
    %387 = vmatpush1.msra.mxu0 %v357
    %388 = vmatprep.subr.mxu0 0.0
    %389 = vmatpush1.msra.mxu0 %v358
    %390 = vmatprep.subr.mxu0 0.0
    %391 = vmatpush1.msra.mxu0 %v359
    %392 = vmatprep.subr.mxu0 0.0
    %393 = vmatpush1.msra.mxu0 %v360
    %394 = vmatprep.subr.mxu0 0.0
    %395 = vmatpush1.msra.mxu0 %v361
    %396 = vmatprep.subr.mxu0 0.0
    %397 = vmatpush1.msra.mxu0 0.0
    %398 = vmatprep.subr.mxu0 0.0
    %399 = vmatpush1.msra.mxu0 0.0
    %400 = vmatprep.subr.mxu0 0.0
    %401 = vmatpush1.msra.mxu0 0.0
    %402 = vmatprep.subr.mxu0 0.0
    %403 = vmatpush1.msra.mxu0 0.0
    %404 = vmatprep.subr.mxu0 0.0
    %405 = vmatpush1.msra.mxu0 0.0
    %406 = vmatprep.subr.mxu0 0.0
    %407 = vmatpush1.msra.mxu0 0.0
    %408 = vmatprep.subr.mxu0 0.0
    %409 = vmatpush1.msra.mxu0 0.0
    %410 = vmatprep.subr.mxu0 0.0
    %411 = vmatpush1.msra.mxu0 0.0
    %412 = vmatprep.subr.mxu0 0.0
    %413 = vmatpush1.msra.mxu0 0.0
    %414 = vmatprep.subr.mxu0 0.0
    %415 = vmatpush1.msra.mxu0 0.0
    %416 = vmatprep.subr.mxu0 0.0
    %417 = vmatpush1.msra.mxu0 0.0
    %418 = vmatprep.subr.mxu0 0.0
    %419 = vmatpush1.msra.mxu0 0.0
    %420 = vmatprep.subr.mxu0 0.0
    %421 = vmatpush1.msra.mxu0 0.0
    %422 = vmatprep.subr.mxu0 0.0
    %423 = vmatpush1.msra.mxu0 0.0
    %424 = vmatprep.subr.mxu0 0.0
    %425 = vmatpush1.msra.mxu0 0.0
    %426 = vmatprep.subr.mxu0 0.0
    %427 = vmatpush1.msra.mxu0 0.0
    %428 = vmatprep.mubr.f32.mxu0 0.0
    %429 = vmatmul.mubr.f32.gmra.mrb[0].mxu0 %v345
    %v430 = vpop.f32.mrb[0].mxu0
    %v431 = vadd.f32 %v363, %v430
    %v432 = vpop.f32.mrb[0].mxu0
    %433 = vdwg.mxu0
    %v434 = vrcp.pop %v431
    %v435 = vmul.f32 %v298, %v434
    %v436 = vmul.f32 %v435, %v345
    %s437 = scalar_lea.vmem [#allocation7], 128
    %v438 = vld [vmem:[%s437] sm:$0xff]
    %v439 = vld [vmem:[%s437 + $0x8] sm:$0xff]
    %v440 = vld [vmem:[%s437 + $0x10] sm:$0xff]
    %v441 = vld [vmem:[%s437 + $0x18] sm:$0xff]
    %v442 = vld [vmem:[%s437 + $0x20] sm:$0xff]
    %v443 = vld [vmem:[%s437 + $0x28] sm:$0xff]
    %v444 = vld [vmem:[%s437 + $0x30] sm:$0xff]
    %v445 = vld [vmem:[%s437 + $0x38] sm:$0xff]
    %v446 = vld [vmem:[%s437 + $0x40] sm:$0xff]
    %v447 = vld [vmem:[%s437 + $0x48] sm:$0xff]
    %v448 = vld [vmem:[%s437 + $0x50] sm:$0xff]
    %v449 = vld [vmem:[%s437 + $0x58] sm:$0xff]
    %v450 = vld [vmem:[%s437 + $0x60] sm:$0xff]
    %v451 = vld [vmem:[%s437 + $0x68] sm:$0xff]
    %v452 = vld [vmem:[%s437 + $0x70] sm:$0xff]
    %v453 = vld [vmem:[%s437 + $0x78] sm:$0xff]
    %v454 = vmul.f32 %v436, 0.02
    %v455 = vadd.f32 %v454, 0.010000119
    %456 = vmatprep.subr.mxu0 0.0
    %457 = vmatpush1.msra.mxu0 %v438
    %458 = vmatprep.subr.mxu0 0.0
    %459 = vmatpush1.msra.mxu0 %v439
    %460 = vmatprep.subr.mxu0 0.0
    %461 = vmatpush1.msra.mxu0 %v440
    %462 = vmatprep.subr.mxu0 0.0
    %463 = vmatpush1.msra.mxu0 %v441
    %464 = vmatprep.subr.mxu0 0.0
    %465 = vmatpush1.msra.mxu0 %v442
    %466 = vmatprep.subr.mxu0 0.0
    %467 = vmatpush1.msra.mxu0 %v443
    %468 = vmatprep.subr.mxu0 0.0
    %469 = vmatpush1.msra.mxu0 %v444
    %470 = vmatprep.subr.mxu0 0.0
    %471 = vmatpush1.msra.mxu0 %v445
    %472 = vmatprep.subr.mxu0 0.0
    %473 = vmatpush1.msra.mxu0 %v446
    %474 = vmatprep.subr.mxu0 0.0
    %475 = vmatpush1.msra.mxu0 %v447
    %476 = vmatprep.subr.mxu0 0.0
    %477 = vmatpush1.msra.mxu0 %v448
    %478 = vmatprep.subr.mxu0 0.0
    %479 = vmatpush1.msra.mxu0 %v449
    %480 = vmatprep.subr.mxu0 0.0
    %481 = vmatpush1.msra.mxu0 %v450
    %482 = vmatprep.subr.mxu0 0.0
    %483 = vmatpush1.msra.mxu0 %v451
    %484 = vmatprep.subr.mxu0 0.0
    %485 = vmatpush1.msra.mxu0 %v452
    %486 = vmatprep.subr.mxu0 0.0
    %487 = vmatpush1.msra.mxu0 %v453
    %488 = vmatprep.subr.mxu0 0.0
    %489 = vmatpush1.msra.mxu0 0.0
    %490 = vmatprep.subr.mxu0 0.0
    %491 = vmatpush1.msra.mxu0 0.0
    %492 = vmatprep.subr.mxu0 0.0
    %493 = vmatpush1.msra.mxu0 0.0
    %494 = vmatprep.subr.mxu0 0.0
    %495 = vmatpush1.msra.mxu0 0.0
    %496 = vmatprep.subr.mxu0 0.0
    %497 = vmatpush1.msra.mxu0 0.0
    %498 = vmatprep.subr.mxu0 0.0
    %499 = vmatpush1.msra.mxu0 0.0
    %500 = vmatprep.subr.mxu0 0.0
    %501 = vmatpush1.msra.mxu0 0.0
    %502 = vmatprep.subr.mxu0 0.0
    %503 = vmatpush1.msra.mxu0 0.0
    %504 = vmatprep.subr.mxu0 0.0
    %505 = vmatpush1.msra.mxu0 0.0
    %506 = vmatprep.subr.mxu0 0.0
    %507 = vmatpush1.msra.mxu0 0.0
    %508 = vmatprep.subr.mxu0 0.0
    %509 = vmatpush1.msra.mxu0 0.0
    %510 = vmatprep.subr.mxu0 0.0
    %511 = vmatpush1.msra.mxu0 0.0
    %512 = vmatprep.subr.mxu0 0.0
    %513 = vmatpush1.msra.mxu0 0.0
    %514 = vmatprep.subr.mxu0 0.0
    %515 = vmatpush1.msra.mxu0 0.0
    %516 = vmatprep.subr.mxu0 0.0
    %517 = vmatpush1.msra.mxu0 0.0
    %518 = vmatprep.subr.mxu0 0.0
    %519 = vmatpush1.msra.mxu0 0.0
    %520 = vmatprep.mubr.f32.mxu0 0.0
    %521 = vmatmul.mubr.f32.gmra.mrb[0].mxu0 %v436
    %v522 = vpop.f32.mrb[0].mxu0
    %v523 = vadd.f32 %v455, %v522
    %v524 = vpop.f32.mrb[0].mxu0
    %525 = vdwg.mxu0
    %v526 = vrcp.pop %v523
    %v527 = vmul.f32 %v300, %v526
    %v528 = vmul.f32 %v527, %v436
    %s529 = scalar_lea.vmem [#allocation7], 256
    %v530 = vld [vmem:[%s529] sm:$0xff]
    %v531 = vld [vmem:[%s529 + $0x8] sm:$0xff]
    %v532 = vld [vmem:[%s529 + $0x10] sm:$0xff]
    %v533 = vld [vmem:[%s529 + $0x18] sm:$0xff]
    %v534 = vld [vmem:[%s529 + $0x20] sm:$0xff]
    %v535 = vld [vmem:[%s529 + $0x28] sm:$0xff]
    %v536 = vld [vmem:[%s529 + $0x30] sm:$0xff]
    %v537 = vld [vmem:[%s529 + $0x38] sm:$0xff]
    %v538 = vld [vmem:[%s529 + $0x40] sm:$0xff]
    %v539 = vld [vmem:[%s529 + $0x48] sm:$0xff]
    %v540 = vld [vmem:[%s529 + $0x50] sm:$0xff]
    %v541 = vld [vmem:[%s529 + $0x58] sm:$0xff]
    %v542 = vld [vmem:[%s529 + $0x60] sm:$0xff]
    %v543 = vld [vmem:[%s529 + $0x68] sm:$0xff]
    %v544 = vld [vmem:[%s529 + $0x70] sm:$0xff]
    %v545 = vld [vmem:[%s529 + $0x78] sm:$0xff]
    %v546 = vmul.f32 %v528, 0.02
    %v547 = vadd.f32 %v546, 0.010000119
    %548 = vmatprep.subr.mxu0 0.0
    %549 = vmatpush1.msra.mxu0 %v530
    %550 = vmatprep.subr.mxu0 0.0
    %551 = vmatpush1.msra.mxu0 %v531
    %552 = vmatprep.subr.mxu0 0.0
    %553 = vmatpush1.msra.mxu0 %v532
    %554 = vmatprep.subr.mxu0 0.0
    %555 = vmatpush1.msra.mxu0 %v533
    %556 = vmatprep.subr.mxu0 0.0
    %557 = vmatpush1.msra.mxu0 %v534
    %558 = vmatprep.subr.mxu0 0.0
    %559 = vmatpush1.msra.mxu0 %v535
    %560 = vmatprep.subr.mxu0 0.0
    %561 = vmatpush1.msra.mxu0 %v536
    %562 = vmatprep.subr.mxu0 0.0
    %563 = vmatpush1.msra.mxu0 %v537
    %564 = vmatprep.subr.mxu0 0.0
    %565 = vmatpush1.msra.mxu0 %v538
    %566 = vmatprep.subr.mxu0 0.0
    %567 = vmatpush1.msra.mxu0 %v539
    %568 = vmatprep.subr.mxu0 0.0
    %569 = vmatpush1.msra.mxu0 %v540
    %570 = vmatprep.subr.mxu0 0.0
    %571 = vmatpush1.msra.mxu0 %v541
    %572 = vmatprep.subr.mxu0 0.0
    %573 = vmatpush1.msra.mxu0 %v542
    %574 = vmatprep.subr.mxu0 0.0
    %575 = vmatpush1.msra.mxu0 %v543
    %576 = vmatprep.subr.mxu0 0.0
    %577 = vmatpush1.msra.mxu0 %v544
    %578 = vmatprep.subr.mxu0 0.0
    %579 = vmatpush1.msra.mxu0 %v545
    %580 = vmatprep.subr.mxu0 0.0
    %581 = vmatpush1.msra.mxu0 0.0
    %582 = vmatprep.subr.mxu0 0.0
    %583 = vmatpush1.msra.mxu0 0.0
    %584 = vmatprep.subr.mxu0 0.0
    %585 = vmatpush1.msra.mxu0 0.0
    %586 = vmatprep.subr.mxu0 0.0
    %587 = vmatpush1.msra.mxu0 0.0
    %588 = vmatprep.subr.mxu0 0.0
    %589 = vmatpush1.msra.mxu0 0.0
    %590 = vmatprep.subr.mxu0 0.0
    %591 = vmatpush1.msra.mxu0 0.0
    %592 = vmatprep.subr.mxu0 0.0
    %593 = vmatpush1.msra.mxu0 0.0
    %594 = vmatprep.subr.mxu0 0.0
    %595 = vmatpush1.msra.mxu0 0.0
    %596 = vmatprep.subr.mxu0 0.0
    %597 = vmatpush1.msra.mxu0 0.0
    %598 = vmatprep.subr.mxu0 0.0
    %599 = vmatpush1.msra.mxu0 0.0
    %600 = vmatprep.subr.mxu0 0.0
    %601 = vmatpush1.msra.mxu0 0.0
    %602 = vmatprep.subr.mxu0 0.0
    %603 = vmatpush1.msra.mxu0 0.0
    %604 = vmatprep.subr.mxu0 0.0
    %605 = vmatpush1.msra.mxu0 0.0
    %606 = vmatprep.subr.mxu0 0.0
    %607 = vmatpush1.msra.mxu0 0.0
    %608 = vmatprep.subr.mxu0 0.0
    %609 = vmatpush1.msra.mxu0 0.0
    %610 = vmatprep.subr.mxu0 0.0
    %611 = vmatpush1.msra.mxu0 0.0
    %612 = vmatprep.mubr.f32.mxu0 0.0
    %613 = vmatmul.mubr.f32.gmra.mrb[0].mxu0 %v528
    %v614 = vpop.f32.mrb[0].mxu0
    %v615 = vadd.f32 %v547, %v614
    %v616 = vpop.f32.mrb[0].mxu0
    %617 = vdwg.mxu0
    %v618 = vrcp.pop %v615
    %v619 = vmul.f32 %v339, %v618
    %v620 = vmul.f32 %v619, %v528
    %s621 = scalar_lea.vmem [#allocation7], 384
    %v622 = vld [vmem:[%s621] sm:$0xff]
    %v623 = vld [vmem:[%s621 + $0x8] sm:$0xff]
    %v624 = vld [vmem:[%s621 + $0x10] sm:$0xff]
    %v625 = vld [vmem:[%s621 + $0x18] sm:$0xff]
    %v626 = vld [vmem:[%s621 + $0x20] sm:$0xff]
    %v627 = vld [vmem:[%s621 + $0x28] sm:$0xff]
    %v628 = vld [vmem:[%s621 + $0x30] sm:$0xff]
    %v629 = vld [vmem:[%s621 + $0x38] sm:$0xff]
    %v630 = vld [vmem:[%s621 + $0x40] sm:$0xff]
    %v631 = vld [vmem:[%s621 + $0x48] sm:$0xff]
    %v632 = vld [vmem:[%s621 + $0x50] sm:$0xff]
    %v633 = vld [vmem:[%s621 + $0x58] sm:$0xff]
    %v634 = vld [vmem:[%s621 + $0x60] sm:$0xff]
    %v635 = vld [vmem:[%s621 + $0x68] sm:$0xff]
    %v636 = vld [vmem:[%s621 + $0x70] sm:$0xff]
    %v637 = vld [vmem:[%s621 + $0x78] sm:$0xff]
    %v638 = vmul.f32 %v620, 0.02
    %v639 = vadd.f32 %v638, 0.010000119
    %640 = vmatprep.subr.mxu0 0.0
    %641 = vmatpush1.msra.mxu0 %v622
    %642 = vmatprep.subr.mxu0 0.0
    %643 = vmatpush1.msra.mxu0 %v623
    %644 = vmatprep.subr.mxu0 0.0
    %645 = vmatpush1.msra.mxu0 %v624
    %646 = vmatprep.subr.mxu0 0.0
    %647 = vmatpush1.msra.mxu0 %v625
    %648 = vmatprep.subr.mxu0 0.0
    %649 = vmatpush1.msra.mxu0 %v626
    %650 = vmatprep.subr.mxu0 0.0
    %651 = vmatpush1.msra.mxu0 %v627
    %652 = vmatprep.subr.mxu0 0.0
    %653 = vmatpush1.msra.mxu0 %v628
    %654 = vmatprep.subr.mxu0 0.0
    %655 = vmatpush1.msra.mxu0 %v629
    %656 = vmatprep.subr.mxu0 0.0
    %657 = vmatpush1.msra.mxu0 %v630
    %658 = vmatprep.subr.mxu0 0.0
    %659 = vmatpush1.msra.mxu0 %v631
    %660 = vmatprep.subr.mxu0 0.0
    %661 = vmatpush1.msra.mxu0 %v632
    %662 = vmatprep.subr.mxu0 0.0
    %663 = vmatpush1.msra.mxu0 %v633
    %664 = vmatprep.subr.mxu0 0.0
    %665 = vmatpush1.msra.mxu0 %v634
    %666 = vmatprep.subr.mxu0 0.0
    %667 = vmatpush1.msra.mxu0 %v635
    %668 = vmatprep.subr.mxu0 0.0
    %669 = vmatpush1.msra.mxu0 %v636
    %670 = vmatprep.subr.mxu0 0.0
    %671 = vmatpush1.msra.mxu0 %v637
    %672 = vmatprep.subr.mxu0 0.0
    %673 = vmatpush1.msra.mxu0 0.0
    %674 = vmatprep.subr.mxu0 0.0
    %675 = vmatpush1.msra.mxu0 0.0
    %676 = vmatprep.subr.mxu0 0.0
    %677 = vmatpush1.msra.mxu0 0.0
    %678 = vmatprep.subr.mxu0 0.0
    %679 = vmatpush1.msra.mxu0 0.0
    %680 = vmatprep.subr.mxu0 0.0
    %681 = vmatpush1.msra.mxu0 0.0
    %682 = vmatprep.subr.mxu0 0.0
    %683 = vmatpush1.msra.mxu0 0.0
    %684 = vmatprep.subr.mxu0 0.0
    %685 = vmatpush1.msra.mxu0 0.0
    %686 = vmatprep.subr.mxu0 0.0
    %687 = vmatpush1.msra.mxu0 0.0
    %688 = vmatprep.subr.mxu0 0.0
    %689 = vmatpush1.msra.mxu0 0.0
    %690 = vmatprep.subr.mxu0 0.0
    %691 = vmatpush1.msra.mxu0 0.0
    %692 = vmatprep.subr.mxu0 0.0
    %693 = vmatpush1.msra.mxu0 0.0
    %694 = vmatprep.subr.mxu0 0.0
    %695 = vmatpush1.msra.mxu0 0.0
    %696 = vmatprep.subr.mxu0 0.0
    %697 = vmatpush1.msra.mxu0 0.0
    %698 = vmatprep.subr.mxu0 0.0
    %699 = vmatpush1.msra.mxu0 0.0
    %700 = vmatprep.subr.mxu0 0.0
    %701 = vmatpush1.msra.mxu0 0.0
    %702 = vmatprep.subr.mxu0 0.0
    %703 = vmatpush1.msra.mxu0 0.0
    %704 = vmatprep.mubr.f32.mxu0 0.0
    %705 = vmatmul.mubr.f32.gmra.mrb[0].mxu0 %v620
    %v706 = vpop.f32.mrb[0].mxu0
    %v707 = vadd.f32 %v639, %v706
    %v708 = vpop.f32.mrb[0].mxu0
    %709 = vdwg.mxu0
    %v710 = vrcp.pop %v707
    %v711 = vmul.f32 %v341, %v710
    %v712 = vmul.f32 %v711, %v620
    %713 = vst [vmem:[#allocation10] sm:$0xff] %v712
    // Predicated region
    $region34: #{tpu_custom_call.1} parent=1 // pred_check
      _
    $region35: #{tpu_custom_call.1} parent=1 // pred_check_branch
      %715 = sbr.rel (0) target = $region37
    $region36: #{tpu_custom_call.1} parent=1 // pred_region
      %s717 = ssub.s32 128, 128
      %718 = vsyncadd [#allocation4], %s717
      %s720 = sshll.u32 [#allocation10], 4
      %s721 = int_to_ptr.vmem [resolvable:$true] %s720
      %723 = dma.vmem_to_hbm [thread:$0]  %s721, 128, %s4, [#allocation4]
    $region37: #{tpu_custom_call.1} parent=1 // pred_fallthru
      _
    // Predicated region
    $region38: #{tpu_custom_call.1} parent=1 // pred_check
      _
    $region39: #{tpu_custom_call.1} parent=1 // pred_check_branch
      %725 = sbr.rel (0) target = $region41
    $region40: #{tpu_custom_call.1} parent=1 // pred_region
      %726 = dma.done [#allocation4], 128
    $region41: #{tpu_custom_call.1} parent=1 // pred_fallthru
      _
    %727 = vsyncpa [#allocation3], 1
    %728 = vsyncpa [#allocation6], 1
    %729 = vsyncpa [#allocation9], 1
    %730 = vsyncpa [#allocation4], 1

</llo_original>
